<compile_context>
chip_gen: v7x
topology: tpu7x:2x2x1
jax: 0.10.0
libtpu: 0.0.40
codegen_flags: <defaults>
</compile_context>

<pallas_src>
import math

import numpy as np

import jax
import jax.numpy as jnp
from jax import lax
from jax.experimental import pallas as pl
from jax.experimental.pallas import tpu as pltpu


_LANE = 128                      # edge-count padding granularity (lane width)
_TM = 128                        # Me row tile (E1 axis)
_TN = 128                        # Me col tile (E2 axis)
_TK = 128                        # assemble reduction tile (E2 axis)
_VMEM_LIMIT = 32 * 1024 * 1024   # explicit scoped-VMEM budget, safe on v5e/v6e/v7x


def _round_up(x, mult):
    return ((max(x, 1) + mult - 1) // mult) * mult


# ---------------------------------------------------------------------------
# Kernel 1: edgewise affinity  Me = X^T W Y  in gathered / weight-folded form.
#   xt: (B, E1P, 2d) = [F_src G1 ; F_src H1]^T  (gathered by edge indices)
#   tb: (B, 2d, E2P) = [L1 Yg + L2 Yh ; L2 Yg + L1 Yh]  (Lambda folded in wrapper)
# ---------------------------------------------------------------------------
def _me_kernel(xt_ref, tb_ref, me_ref):
    me_ref[0, :, :] = jnp.dot(xt_ref[0], tb_ref[0],
                              preferred_element_type=jnp.float32)


def _me_call(xt, tb):
    B, E1P, two_d = xt.shape
    E2P = tb.shape[2]
    grid = (B, E1P // _TM, E2P // _TN)
    return pl.pallas_call(
        _me_kernel,
        out_shape=jax.ShapeDtypeStruct((B, E1P, E2P), jnp.float32),
        grid=grid,
        in_specs=[pl.BlockSpec((1, _TM, two_d), lambda b, i, j: (b, i, 0)),
                  pl.BlockSpec((1, two_d, _TN), lambda b, i, j: (b, 0, j))],
        out_specs=pl.BlockSpec((1, _TM, _TN), lambda b, i, j: (b, i, j)),
        compiler_params=pltpu.CompilerParams(
            dimension_semantics=("parallel", "parallel", "parallel"),
            vmem_limit_bytes=_VMEM_LIMIT),
    )(xt, tb)


# ---------------------------------------------------------------------------
# Kernel 2: pointwise affinity  Mp = U_src^T U_tgt  (batched, tiny).
# ---------------------------------------------------------------------------
def _mp_kernel(ust_ref, ut_ref, mp_ref):
    mp_ref[0, :, :] = jnp.dot(ust_ref[0], ut_ref[0],
                              preferred_element_type=jnp.float32)


def _mp_call(ust, ut):
    B, n, d = ust.shape
    m = ut.shape[2]
    return pl.pallas_call(
        _mp_kernel,
        out_shape=jax.ShapeDtypeStruct((B, n, m), jnp.float32),
        grid=(B,),
        in_specs=[pl.BlockSpec((1, n, d), lambda b: (b, 0, 0)),
                  pl.BlockSpec((1, d, m), lambda b: (b, 0, 0))],
        out_specs=pl.BlockSpec((1, n, m), lambda b: (b, 0, 0)),
        compiler_params=pltpu.CompilerParams(
            dimension_semantics=("parallel",),
            vmem_limit_bytes=_VMEM_LIMIT),
    )(ust, ut)


# ---------------------------------------------------------------------------
# Kernel 3: implicit-Kronecker assemble  R = W2 @ (V @ W1^T),
#   W2:  (B, m*m, E2P)  one-hot tgt-edge -> (a,a') scatter factor
#   V:   (B, E2P, E1P)  re-indexed vec(Me) values (reference scaling quirk)
#   W1T: (B, E1P, n*n)  one-hot src-edge -> (c,c') scatter factor
# E2 is the reduction grid axis (last), accumulated in a VMEM scratch.
# ---------------------------------------------------------------------------
def _assemble_kernel(w2_ref, v_ref, w1t_ref, r_ref, acc_ref):
    k = pl.program_id(1)

    @pl.when(k == 0)
    def _init():
        acc_ref[...] = jnp.zeros_like(acc_ref)

    blk = jnp.dot(v_ref[0], w1t_ref[0], preferred_element_type=jnp.float32)
    acc_ref[...] += jnp.dot(w2_ref[0], blk, preferred_element_type=jnp.float32)

    @pl.when(k == pl.num_programs(1) - 1)
    def _fin():
        r_ref[0, :, :] = acc_ref[...]


def _assemble_call(w2_all, v_all, w1t_all):
    B, m2, E2P = w2_all.shape
    E1P = v_all.shape[2]
    n2 = w1t_all.shape[2]
    grid = (B, E2P // _TK)
    flops = 2 * B * (E2P * E1P * n2 + m2 * E2P * n2)
    bytes_accessed = 4 * (w2_all.size + v_all.size + w1t_all.size + B * m2 * n2)
    # TODO(synk): for very large n/E, additionally tile W1T over the n^2 axis.
    return pl.pallas_call(
        _assemble_kernel,
        out_shape=jax.ShapeDtypeStruct((B, m2, n2), jnp.float32),
        grid=grid,
        in_specs=[pl.BlockSpec((1, m2, _TK), lambda b, k: (b, 0, k)),
                  pl.BlockSpec((1, _TK, E1P), lambda b, k: (b, k, 0)),
                  pl.BlockSpec((1, E1P, n2), lambda b, k: (b, 0, 0))],
        out_specs=pl.BlockSpec((1, m2, n2), lambda b, k: (b, 0, 0)),
        scratch_shapes=[pltpu.VMEM((m2, n2), jnp.float32)],
        compiler_params=pltpu.CompilerParams(
            dimension_semantics=("parallel", "arbitrary"),
            vmem_limit_bytes=_VMEM_LIMIT),
        cost_estimate=pl.CostEstimate(flops=flops, transcendentals=0,
                                      bytes_accessed=bytes_accessed),
    )(w2_all, v_all, w1t_all)


# ---------------------------------------------------------------------------
# Kernel 4: finalize  M = M_off + diag(vec(Mp))  (tiny separate pass).
# ---------------------------------------------------------------------------
def _finalize_kernel(moff_ref, vmp_ref, out_ref):
    nm = out_ref.shape[1]
    rows = lax.broadcasted_iota(jnp.int32, (nm, nm), 0)
    cols = lax.broadcasted_iota(jnp.int32, (nm, nm), 1)
    diag = jnp.where(rows == cols,
                     jnp.broadcast_to(vmp_ref[0], (nm, nm)),
                     jnp.zeros((nm, nm), jnp.float32))
    out_ref[0, :, :] = moff_ref[0] + diag


def _finalize_call(moff, vmp):
    B, nm, _ = moff.shape
    # TODO(synk): when nm is large enough to tile, restrict the diag add to
    # diagonal tiles via pl.when(i == j) instead of a full iota compare.
    return pl.pallas_call(
        _finalize_kernel,
        out_shape=jax.ShapeDtypeStruct((B, nm, nm), jnp.float32),
        grid=(B,),
        in_specs=[pl.BlockSpec((1, nm, nm), lambda b: (b, 0, 0)),
                  pl.BlockSpec((1, 1, nm), lambda b: (b, 0, 0))],
        out_specs=pl.BlockSpec((1, nm, nm), lambda b: (b, 0, 0)),
        compiler_params=pltpu.CompilerParams(
            dimension_semantics=("parallel",),
            vmem_limit_bytes=_VMEM_LIMIT),
    )(moff, vmp)


class AffinityPallas:
    """JAX/Pallas port of GL.affinity_old.Affinity (forward only)."""

    def __init__(self, d, key):
        self.d = d
        stdv = 1.0 / math.sqrt(d * 2)
        k1, k2 = jax.random.split(key)
        eye = jnp.eye(d, dtype=jnp.float32) / 2.0
        self.lambda1 = jax.random.uniform(k1, (d, d), jnp.float32, -stdv, stdv) + eye
        self.lambda2 = jax.random.uniform(k2, (d, d), jnp.float32, -stdv, stdv) + eye

    @staticmethod
    def _edges(a_np):
        # Reference quirk: the column count uses threshold 0.48 while the G/H
        # entries use 0.49 (the extra "phantom" edge columns stay all-zero).
        e = int(np.sum(a_np >= 0.48))
        entries = np.argwhere(a_np >= 0.49)       # row-major == torch.nonzero order
        src = entries[:, 0].astype(np.int32)
        tgt = entries[:, 1].astype(np.int32)
        return e, entries.shape[0], src, tgt

    def __call__(self, A_src, A_tgt, F_src, F_tgt, U_src, U_tgt, w1=1.0, w2=1.0):
        B, n = A_src.shape[0], A_src.shape[1]
        m = A_tgt.shape[1]

        # Batch-invariant weight prep, hoisted out of the kernels.
        L1 = jnp.maximum(self.lambda1 + self.lambda1.T, 0.0) * w1
        L2 = jnp.maximum(self.lambda2 + self.lambda2.T, 0.0) * w2

        # TODO(synk): the data-dependent edge extraction (torch .item()/nonzero
        # host loop) has no Pallas equivalent; it stays on the host and only
        # emits padded index arrays and tiny 0/1 scatter factors.
        A_src_np = np.asarray(A_src)
        A_tgt_np = np.asarray(A_tgt)
        src_info = [self._edges(A_src_np[i]) for i in range(B)]
        tgt_info = [self._edges(A_tgt_np[i]) for i in range(B)]

        E1P = _round_up(max(e for e, _, _, _ in src_info), _LANE)
        E2P = _round_up(max(e for e, _, _, _ in tgt_info), _LANE)

        xt_l, tb_l, w1t_l, w2_l = [], [], [], []
        for i in range(B):
            e1, r1, s1, t1 = src_info[i]
            e2, r2, s2, t2 = tgt_info[i]

            s1p = np.zeros(E1P, np.int32); s1p[:r1] = s1
            t1p = np.zeros(E1P, np.int32); t1p[:r1] = t1
            s2p = np.zeros(E2P, np.int32); s2p[:r2] = s2
            t2p = np.zeros(E2P, np.int32); t2p[:r2] = t2
            mask1 = jnp.asarray((np.arange(E1P) < r1).astype(np.float32))[None, :]
            mask2 = jnp.asarray((np.arange(E2P) < r2).astype(np.float32))[None, :]

            # Gathered edge features (replaces the F @ G / F @ H one-hot matmuls).
            Fi, Gi = F_src[i], F_tgt[i]
            xg = jnp.take(Fi, jnp.asarray(s1p), axis=1) * mask1        # (d, E1P)
            xh = jnp.take(Fi, jnp.asarray(t1p), axis=1) * mask1
            xt_l.append(jnp.concatenate([xg, xh], axis=0).T)           # (E1P, 2d)

            # Fold Lambda into the target features (weight is batch-invariant).
            a1 = jnp.dot(L1, Gi)                                       # (d, m)
            a2 = jnp.dot(L2, Gi)
            top = (jnp.take(a1, jnp.asarray(s2p), axis=1)
                   + jnp.take(a2, jnp.asarray(t2p), axis=1)) * mask2   # (d, E2P)
            bot = (jnp.take(a2, jnp.asarray(s2p), axis=1)
                   + jnp.take(a1, jnp.asarray(t2p), axis=1)) * mask2
            tb_l.append(jnp.concatenate([top, bot], axis=0))           # (2d, E2P)

            # Small one-hot scatter factors (implicit Kronecker; never (nm, E)).
            w1t_i = np.zeros((E1P, n * n), np.float32)
            w1t_i[np.arange(r1), s1 * n + t1] = 1.0
            w2_i = np.zeros((m * m, E2P), np.float32)
            w2_i[s2 * m + t2, np.arange(r2)] = 1.0
            w1t_l.append(w1t_i)
            w2_l.append(w2_i)

        xt = jnp.stack(xt_l)                                           # (B, E1P, 2d)
        tb = jnp.stack(tb_l)                                           # (B, 2d, E2P)
        ust = jnp.transpose(U_src, (0, 2, 1))                          # (B, n, d)

        me = _me_call(xt, tb)                                          # (B, E1P, E2P)
        mp = _mp_call(ust, U_tgt)                                      # (B, n, m)

        # Reference scaling quirk: K1[:, j] is scaled by vec(Me)[j] with
        # j = b*e1 + d, i.e. V = Me.reshape(-1).reshape(e2, e1) over the TRUE
        # (unpadded) edge counts.  Re-index on the host glue, then re-pad.
        v_l = []
        for i in range(B):
            e1 = src_info[i][0]
            e2 = tgt_info[i][0]
            v_i = me[i, :e1, :e2].reshape(e2, e1)
            v_l.append(jnp.pad(v_i, ((0, E2P - e2), (0, E1P - e1))))
        v_all = jnp.stack(v_l)                                         # (B, E2P, E1P)
        w1t_all = jnp.asarray(np.stack(w1t_l))                         # (B, E1P, n*n)
        w2_all = jnp.asarray(np.stack(w2_l))                           # (B, m*m, E2P)

        # TODO(synk): cast w1t_all/w2_all (exact 0/1) to bf16 on v6e/v7x for 2x
        # MXU/DMA; kept f32 here so Me values are never rounded below f32.
        r_all = _assemble_call(w2_all, v_all, w1t_all)                 # (B, m*m, n*n)

        # Layout plumbing: rows/cols (a, a')x(c, c') -> (a, c)x(a', c').
        m_off = (r_all.reshape(B, m, m, n, n)
                 .transpose(0, 1, 3, 2, 4)
                 .reshape(B, m * n, m * n))
        vmp = mp.reshape(B, 1, n * m)
        return _finalize_call(m_off, vmp)


def _reference_forward(lambda1, lambda2, A_src, A_tgt, F_src, F_tgt,
                       U_src, U_tgt, w1=1.0, w2=1.0):
    """Direct numpy transcription of the PyTorch reference (float64)."""
    l1 = np.asarray(lambda1, np.float64)
    l2 = np.asarray(lambda2, np.float64)
    L1 = np.maximum(l1 + l1.T, 0.0) * w1
    L2 = np.maximum(l2 + l2.T, 0.0) * w2
    weight = np.block([[L1, L2], [L2, L1]])
    A_src = np.asarray(A_src); A_tgt = np.asarray(A_tgt)
    F_src = np.asarray(F_src, np.float64); F_tgt = np.asarray(F_tgt, np.float64)
    U_src = np.asarray(U_src, np.float64); U_tgt = np.asarray(U_tgt, np.float64)
    B, _, n = F_src.shape
    m = F_tgt.shape[2]
    out = np.zeros((B, n * m, n * m), np.float64)
    for i in range(B):
        e1 = int(np.sum(A_src[i] >= 0.48)); e2 = int(np.sum(A_tgt[i] >= 0.48))
        G1 = np.zeros((n, e1)); H1 = np.zeros((n, e1))
        for cnt, (k, j) in enumerate(np.argwhere(A_src[i] >= 0.49)):
            G1[k, cnt] = 1.0; H1[j, cnt] = 1.0
        G2 = np.zeros((m, e2)); H2 = np.zeros((m, e2))
        for cnt, (k, j) in enumerate(np.argwhere(A_tgt[i] >= 0.49)):
            G2[k, cnt] = 1.0; H2[j, cnt] = 1.0
        X = np.concatenate([F_src[i] @ G1, F_src[i] @ H1], axis=0)
        Y = np.concatenate([F_tgt[i] @ G2, F_tgt[i] @ H2], axis=0)
        Me = X.T @ weight @ Y
        Mp = U_src[i].T @ U_tgt[i]
        K1 = np.einsum('ab,cd->acbd', G2, G1).reshape(m * n, e2 * e1)
        K2 = np.einsum('ab,cd->acbd', H2, H1).reshape(m * n, e2 * e1)
        K1_new = K1 * Me.reshape(-1)[None, :]
        out[i] = np.diag(Mp.reshape(-1)) + K1_new @ K2.T
    return out


if __name__ == "__main__":
    key = jax.random.PRNGKey(0)
    k_param, k_a1, k_a2, k_f1, k_f2, k_u1, k_u2 = jax.random.split(key, 7)

    B, n, m, d = 2, 8, 8, 16
    aff = AffinityPallas(d, k_param)

    A_src = jax.random.uniform(k_a1, (B, n, n), jnp.float32)
    A_tgt = jax.random.uniform(k_a2, (B, m, m), jnp.float32)
    F_src = jax.random.normal(k_f1, (B, d, n), jnp.float32)
    F_tgt = jax.random.normal(k_f2, (B, d, m), jnp.float32)
    U_src = jax.random.normal(k_u1, (B, d, n), jnp.float32)
    U_tgt = jax.random.normal(k_u2, (B, d, m), jnp.float32)

    M = aff(A_src, A_tgt, F_src, F_tgt, U_src, U_tgt)
    M = jax.block_until_ready(M)
    assert M.shape == (B, n * m, n * m)
    assert M.dtype == jnp.float32

    ref = _reference_forward(aff.lambda1, aff.lambda2, A_src, A_tgt,
                             F_src, F_tgt, U_src, U_tgt)
    assert np.allclose(np.asarray(M, dtype=np.float64), ref,
                       rtol=5e-2, atol=5e-1), \
        f"max abs err {np.max(np.abs(np.asarray(M, dtype=np.float64) - ref))}"
    print("KERNEL_OK")
</pallas_src>

<mosaic_0001>
module attributes {stable_mosaic.version = 11 : i64} {
  func.func @_me_kernel(%arg0: i32, %arg1: i32, %arg2: i32, %arg3: memref<1x128x32xf32, #tpu.memory_space<vmem>>, %arg4: memref<1x32x128xf32, #tpu.memory_space<vmem>>, %arg5: memref<1x128x128xf32, #tpu.memory_space<vmem>>) attributes {dimension_semantics = [#tpu.dimension_semantics<parallel>, #tpu.dimension_semantics<parallel>, #tpu.dimension_semantics<parallel>], iteration_bounds = array<i64: 2, 1, 1>, scalar_prefetch = 0 : i64, scratch_operands = 0 : i64, tpu.core_type = #tpu.core_type<tc>, window_params = [{transform_indices = @transform_0, window_bounds = array<i64: 1, 128, 32>}, {transform_indices = @transform_1, window_bounds = array<i64: 1, 32, 128>}, {transform_indices = @transform_2, window_bounds = array<i64: 1, 128, 128>}]} {
    %c0 = arith.constant 0 : index
    %c0_0 = arith.constant 0 : index
    %c0_1 = arith.constant 0 : index
    %0 = vector.load %arg3[%c0, %c0_0, %c0_1] : memref<1x128x32xf32, #tpu.memory_space<vmem>>, vector<1x128x32xf32>
    %1 = vector.shape_cast %0 : vector<1x128x32xf32> to vector<128x32xf32>
    %c0_2 = arith.constant 0 : index
    %c0_3 = arith.constant 0 : index
    %c0_4 = arith.constant 0 : index
    %2 = vector.load %arg4[%c0_2, %c0_3, %c0_4] : memref<1x32x128xf32, #tpu.memory_space<vmem>>, vector<1x32x128xf32>
    %3 = vector.shape_cast %2 : vector<1x32x128xf32> to vector<32x128xf32>
    %cst = arith.constant dense<0.000000e+00> : vector<128x128xf32>
    %4 = tpu.matmul %1, %3, %cst {dimension_numbers = #tpu.dot_dimension_numbers<[1], [0], [0], [1], [0, 0, 1, 1], [], []>} : vector<128x32xf32>, vector<32x128xf32>, vector<128x128xf32> -> vector<128x128xf32>
    %c0_5 = arith.constant 0 : index
    %c0_6 = arith.constant 0 : index
    %c0_7 = arith.constant 0 : index
    %5 = vector.load %arg5[%c0_5, %c0_6, %c0_7] : memref<1x128x128xf32, #tpu.memory_space<vmem>>, vector<1x128x128xf32>
    %6 = vector.shape_cast %5 : vector<1x128x128xf32> to vector<128x128xf32>
    %7 = vector.shape_cast %4 : vector<128x128xf32> to vector<1x128x128xf32>
    tpu.vector_store %arg5[%c0_5, %c0_6, %c0_7], %7 {strides = array<i32>} : memref<1x128x128xf32, #tpu.memory_space<vmem>>, vector<1x128x128xf32>,
    return
  }
  func.func @transform_0(%arg0: i32, %arg1: i32, %arg2: i32) -> (i32, i32, i32) {
    %c0_i32 = arith.constant 0 : i32
    %c0_i32_0 = arith.constant 0 : i32
    return %arg0, %arg1, %c0_i32 : i32, i32, i32
  }
  func.func @transform_1(%arg0: i32, %arg1: i32, %arg2: i32) -> (i32, i32, i32) {
    %c0_i32 = arith.constant 0 : i32
    %c0_i32_0 = arith.constant 0 : i32
    return %arg0, %c0_i32, %arg2 : i32, i32, i32
  }
  func.func @transform_2(%arg0: i32, %arg1: i32, %arg2: i32) -> (i32, i32, i32) {
    %c0_i32 = arith.constant 0 : i32
    return %arg0, %arg1, %arg2 : i32, i32, i32
  }
}

</mosaic_0001>

<llo_original>
// kernel: tpu_custom_call.1
$region0: #{tpu_custom_call.1}
  #allocation0 [shape = 'u32[]', space=smem, size = 0x4, offset = 0x4, fixed_abs, tag = 'smem constant byte address 0x4 - core index']
  #allocation1 [shape = 'u32[144,128]{1,0:T(1,128)}', space=vmem, size = 0x12000, scoped, tag = 'internal scratch']
  %s0 = inlined_call_operand.vmem [shape: f32[2,128,32], index: 0, kind: input, shape index: {}]
  %s1 = inlined_call_operand.vmem [shape: f32[2,32,128], index: 1, kind: input, shape index: {}]
  %s2 = inlined_call_operand.hbm [shape: f32[2,128,128], index: 2, kind: output, shape index: {}]
  %s3 = sld [smem:[#allocation0]]
  $region41: #{tpu_custom_call.1} parent=0
    _
  %s5 = ssub.s32 1, %s3
  %s6 = scalar_select 0, %s5, %s3
  $region1: #{tpu_custom_call.1} parent=0
    #allocation2 [shape = 'u8[131072]{0}', space=vmem, size = 0x20000, scoped, tag = 'output window, operand 0']
    #allocation3 [shape = 's32[2]{0}', space=sflag, size = 0x8, scoped, tag = 'scoped memory for tpu_custom_call.1']
    %7 = vsyncpa [#allocation3], 0
    %s8 = scalar_lea.sflag [#allocation3], 1
    %9 = vsyncpa %s8, 0
    loop: start=0, step=1, limit=4
    $region2: #{tpu_custom_call.1} parent=1 // loop_pre_header
      _
    $region3: #{tpu_custom_call.1} parent=1 // loop_header
      %s11 = sphi 0, %s15
      %p12 = scmp.ge.s32.totalorder %s11, 4
      %s18 = sphi 0, %s37
      %s19 = sphi 0, %s33
      %s20 = sphi 0, %s29
      %s21 = sphi 0, %s18
      %s22 = sphi 0, %s19
      %s23 = sphi 0, %s20
      %s24 = sphi 0, %s21
      %s25 = sphi 0, %s22
      %s26 = sphi 0, %s23
      %s42 = sphi 0, %s44
      %s45 = sphi 0, %s42
      %s46 = sphi 0, %s45
      %s62 = sphi 0, %s46
      %s70 = sphi 0, %s72
      %s73 = sphi 0, %s70
      %s74 = sphi 0, %s73
      %s90 = sphi 0, %s74
      %s100 = sphi 0, %s102
      %s103 = sphi 0, %s100
      %s104 = sphi 0, %s103
      %s120 = sphi 0, %s104
    $region4: #{tpu_custom_call.1} parent=1 // loop_header_branch
      %14 = sbr.rel (%p12) target = $region8
    $region5: #{tpu_custom_call.1} parent=1 // loop_body
      %s16 = ssub.s32 %s11, 1
      %s17 = ssub.s32 %s11, 2
      %s27 = sadd.s32 1, %s20
      %p28 = scmp.ge.s32.totalorder %s27, 1
      %s29 = scalar_select %p28, 0, %s27
      %s30 = sadd.s32 1, %s19
      %s31 = scalar_select %p28, %s30, %s19
      %p32 = scmp.ge.s32.totalorder %s31, 1
      %s33 = scalar_select %p32, 0, %s31
      %s34 = sadd.s32 1, %s18
      %s35 = scalar_select %p32, %s34, %s18
      %p36 = scmp.ge.s32.totalorder %s35, 2
      %s37 = scalar_select %p36, 0, %s35
      %s38 = ssub.s32 %s18, %s37
      %s39 = ssub.s32 %s19, %s33
      %s40 = sor.u32 %s38, %s39
      %p41 = scmp.eq.s32.totalorder %s40, 0
      %s43 = sadd.s32 %s42, 1
      %s44 = scalar_select %p41, %s42, %s43
      %p47 = pneg %p41
      %p48 = scmp.eq.s32.totalorder %s11, 1
      %p49 = por %p47, %p48
      %p50 = scmp.ne.s32.totalorder %s42, %s45
      %p51 = scmp.eq.s32.totalorder %s11, 0
      %p52 = por %p50, %p51
      %p53 = scmp.ne.s32.totalorder %s42, %s45
      %p54 = scmp.eq.s32.totalorder %s16, 1
      %p55 = por %p53, %p54
      %p56 = scmp.ne.s32.totalorder %s45, %s46
      %p57 = scmp.eq.s32.totalorder %s16, 0
      %p58 = por %p56, %p57
      %p59 = scmp.ne.s32.totalorder %s45, %s46
      %p60 = scmp.eq.s32.totalorder %s17, 1
      %p61 = por %p59, %p60
      %p63 = scmp.ne.s32.totalorder %s46, %s62
      %p64 = scmp.eq.s32.totalorder %s17, 0
      %p65 = por %p63, %p64
      %s66 = ssub.s32 %s18, %s37
      %s67 = ssub.s32 %s20, %s29
      %s68 = sor.u32 %s66, %s67
      %p69 = scmp.eq.s32.totalorder %s68, 0
      %s71 = sadd.s32 %s70, 1
      %s72 = scalar_select %p69, %s70, %s71
      %p75 = pneg %p69
      %p76 = scmp.eq.s32.totalorder %s11, 1
      %p77 = por %p75, %p76
      %p78 = scmp.ne.s32.totalorder %s70, %s73
      %p79 = scmp.eq.s32.totalorder %s11, 0
      %p80 = por %p78, %p79
      %p81 = scmp.ne.s32.totalorder %s70, %s73
      %p82 = scmp.eq.s32.totalorder %s16, 1
      %p83 = por %p81, %p82
      %p84 = scmp.ne.s32.totalorder %s73, %s74
      %p85 = scmp.eq.s32.totalorder %s16, 0
      %p86 = por %p84, %p85
      %p87 = scmp.ne.s32.totalorder %s73, %s74
      %p88 = scmp.eq.s32.totalorder %s17, 1
      %p89 = por %p87, %p88
      %p91 = scmp.ne.s32.totalorder %s74, %s90
      %p92 = scmp.eq.s32.totalorder %s17, 0
      %p93 = por %p91, %p92
      %s94 = ssub.s32 %s18, %s37
      %s95 = ssub.s32 %s19, %s33
      %s96 = sor.u32 %s94, %s95
      %s97 = ssub.s32 %s20, %s29
      %s98 = sor.u32 %s96, %s97
      %p99 = scmp.eq.s32.totalorder %s98, 0
      %s101 = sadd.s32 %s100, 1
      %s102 = scalar_select %p99, %s100, %s101
      %p105 = pneg %p99
      %p106 = scmp.eq.s32.totalorder %s11, 1
      %p107 = por %p105, %p106
      %p108 = scmp.ne.s32.totalorder %s100, %s103
      %p109 = scmp.eq.s32.totalorder %s11, 0
      %p110 = por %p108, %p109
      %p111 = scmp.ne.s32.totalorder %s100, %s103
      %p112 = scmp.eq.s32.totalorder %s16, 1
      %p113 = por %p111, %p112
      %p114 = scmp.ne.s32.totalorder %s103, %s104
      %p115 = scmp.eq.s32.totalorder %s16, 0
      %p116 = por %p114, %p115
      %p117 = scmp.ne.s32.totalorder %s103, %s104
      %p118 = scmp.eq.s32.totalorder %s17, 1
      %p119 = por %p117, %p118
      %p121 = scmp.ne.s32.totalorder %s104, %s120
      %p122 = scmp.eq.s32.totalorder %s17, 0
      %p123 = por %p121, %p122
      %p124 = scmp.le.s32.totalorder 1, %s11
      %p125 = scmp.lt.s32.totalorder %s11, 3
      %p126 = pnand %p124, %p125
      %p127 = pneg %p126
      // Predicated region
      $region9: #{tpu_custom_call.1} parent=5 // pred_check
        _
      $region10: #{tpu_custom_call.1} parent=5 // pred_check_branch
        %129 = sbr.rel (%p126) target = $region12
      $region11: #{tpu_custom_call.1} parent=5 // pred_region
        %s130 = ssub.s32 %s11, 1
      $region12: #{tpu_custom_call.1} parent=5 // pred_fallthru
        _
      %p131 = scmp.lt.s32.totalorder %s11, 2
      // Predicated region
      $region13: #{tpu_custom_call.1} parent=5 // pred_check
        %p132 = pneg %p131
      $region14: #{tpu_custom_call.1} parent=5 // pred_check_branch
        %134 = sbr.rel (%p132) target = $region16
      $region15: #{tpu_custom_call.1} parent=5 // pred_region
        // Predicated region
        $region17: #{tpu_custom_call.1} parent=15 // pred_check
          %p135 = pneg %p52
        $region18: #{tpu_custom_call.1} parent=15 // pred_check_branch
          %137 = sbr.rel (%p135) target = $region20
        $region19: #{tpu_custom_call.1} parent=15 // pred_region
          %s138 = smul.u32 16, %s19
          %p139 = scmp.lt.s32.totalorder %s18, 1
          %s140 = scalar_select %p139, %s18, 1
          %p141 = scmp.lt.s32.totalorder %s138, 15
          %s142 = scalar_select %p141, %s138, 15
          %s143 = smul.addr %s140, 16
          %s144 = sadd.s32 %s142, %s143
          %s145 = smul.addr %s144, 8
          %s146 = scalar_lea.vmem %s0, %s145
          %s147 = smul.u32 16, %s19
        $region20: #{tpu_custom_call.1} parent=15 // pred_fallthru
          _
        // Predicated region
        $region21: #{tpu_custom_call.1} parent=15 // pred_check
          %p148 = pneg %p80
        $region22: #{tpu_custom_call.1} parent=15 // pred_check_branch
          %150 = sbr.rel (%p148) target = $region24
        $region23: #{tpu_custom_call.1} parent=15 // pred_region
          %p151 = scmp.lt.s32.totalorder %s18, 1
          %s152 = scalar_select %p151, %s18, 1
          %p153 = scmp.lt.s32.totalorder %s20, 0
          %s154 = scalar_select %p153, %s20, 0
          %s155 = smul.addr %s152, 4
          %s156 = sadd.s32 %s154, %s155
          %s157 = smul.addr %s156, 8
          %s158 = scalar_lea.vmem %s1, %s157
        $region24: #{tpu_custom_call.1} parent=15 // pred_fallthru
          _
      $region16: #{tpu_custom_call.1} parent=5 // pred_fallthru
        _
      %p159 = scmp.le.s32.totalorder 1, %s11
      %p160 = scmp.lt.s32.totalorder %s11, 3
      %p161 = pnand %p159, %p160
      %p162 = pneg %p161
      // Predicated region
      $region25: #{tpu_custom_call.1} parent=5 // pred_check
        _
      $region26: #{tpu_custom_call.1} parent=5 // pred_check_branch
        %164 = sbr.rel (%p161) target = $region28
      $region27: #{tpu_custom_call.1} parent=5 // pred_region
        %s165 = ssub.s32 %s11, 1
        %s166 = smul.u32 16, %s22
        %p167 = scmp.lt.s32.totalorder %s21, 1
        %s168 = scalar_select %p167, %s21, 1
        %p169 = scmp.lt.s32.totalorder %s166, 15
        %s170 = scalar_select %p169, %s166, 15
        %s171 = smul.addr %s168, 16
        %s172 = sadd.s32 %s170, %s171
        %s173 = smul.addr %s172, 8
        %s174 = scalar_lea.vmem %s0, %s173
        %p175 = pneg %p58
        %p176 = pneg %p55
        %p177 = scmp.lt.s32.totalorder %s21, 1
        %s178 = scalar_select %p177, %s21, 1
        %p179 = scmp.lt.s32.totalorder %s23, 0
        %s180 = scalar_select %p179, %s23, 0
        %s181 = smul.addr %s178, 4
        %s182 = sadd.s32 %s180, %s181
        %s183 = smul.addr %s182, 8
        %s184 = scalar_lea.vmem %s1, %s183
        %p185 = pneg %p86
        %p186 = pneg %p83
        %p187 = pneg %p116
        %p188 = pneg %p113
        %s189 = sand.u32 %s103, 1
        %s190 = scalar_lea.sflag [#allocation3], %s189
        %s191 = sand.u32 %s103, 1
        %s192 = smul.addr %s191, 128
        %s193 = scalar_lea.vmem [#allocation2], %s192
        %s194 = smul.u32 16, %s22
        %p195 = scmp.lt.s32.totalorder %s21, 1
        %s196 = scalar_select %p195, %s21, 1
        %p197 = scmp.lt.s32.totalorder %s194, 15
        %s198 = scalar_select %p197, %s194, 15
        %s199 = smul.addr %s196, 16
        %s200 = sadd.s32 %s198, %s199
        %s201 = smul.addr %s200, 8
        %s202 = scalar_lea.vmem %s0, %s201
        %s203 = smul.u32 16, %s22
        %p204 = scmp.lt.s32.totalorder %s21, 1
        %s205 = scalar_select %p204, %s21, 1
        %p206 = scmp.lt.s32.totalorder %s23, 0
        %s207 = scalar_select %p206, %s23, 0
        %s208 = smul.addr %s205, 4
        %s209 = sadd.s32 %s207, %s208
        %s210 = smul.addr %s209, 8
        %s211 = scalar_lea.vmem %s1, %s210
        %s212 = smul.u32 16, %s22
        %v213 = vld [vmem:[%s202] sm:$0xff]
        %v214 = vld [vmem:[%s202 + $0x8] sm:$0xff]
        %v215 = vld [vmem:[%s202 + $0x10] sm:$0xff]
        %v216 = vld [vmem:[%s202 + $0x18] sm:$0xff]
        %v217 = vld [vmem:[%s202 + $0x20] sm:$0xff]
        %v218 = vld [vmem:[%s202 + $0x28] sm:$0xff]
        %v219 = vld [vmem:[%s202 + $0x30] sm:$0xff]
        %v220 = vld [vmem:[%s202 + $0x38] sm:$0xff]
        %v221 = vld [vmem:[%s202 + $0x40] sm:$0xff]
        %v222 = vld [vmem:[%s202 + $0x48] sm:$0xff]
        %v223 = vld [vmem:[%s202 + $0x50] sm:$0xff]
        %v224 = vld [vmem:[%s202 + $0x58] sm:$0xff]
        %v225 = vld [vmem:[%s202 + $0x60] sm:$0xff]
        %v226 = vld [vmem:[%s202 + $0x68] sm:$0xff]
        %v227 = vld [vmem:[%s202 + $0x70] sm:$0xff]
        %v228 = vld [vmem:[%s202 + $0x78] sm:$0xff]
        %v229 = vld [vmem:[%s211] sm:$0xff]
        %v230 = vld [vmem:[%s211 + $0x8] sm:$0xff]
        %v231 = vld [vmem:[%s211 + $0x10] sm:$0xff]
        %v232 = vld [vmem:[%s211 + $0x18] sm:$0xff]
        %vm233 = vcmask 261120
        %v235 = vsel %vm233, %v213, 0
        %v238 = vsel %vm233, %v214, 0
        %v241 = vsel %vm233, %v215, 0
        %v244 = vsel %vm233, %v216, 0
        %v247 = vsel %vm233, %v217, 0
        %v250 = vsel %vm233, %v218, 0
        %v253 = vsel %vm233, %v219, 0
        %v256 = vsel %vm233, %v220, 0
        %v259 = vsel %vm233, %v221, 0
        %v262 = vsel %vm233, %v222, 0
        %v265 = vsel %vm233, %v223, 0
        %v268 = vsel %vm233, %v224, 0
        %v271 = vsel %vm233, %v225, 0
        %v274 = vsel %vm233, %v226, 0
        %v277 = vsel %vm233, %v227, 0
        %v280 = vsel %vm233, %v228, 0
        %282 = vmatprep.subr.mxu0 0.0
        %283 = vmatpush1.msra.mxu0 %v229
        %284 = vmatprep.subr.mxu0 0.0
        %285 = vmatpush1.msra.mxu0 %v230
        %286 = vmatprep.subr.mxu0 0.0
        %287 = vmatpush1.msra.mxu0 %v231
        %288 = vmatprep.subr.mxu0 0.0
        %289 = vmatpush1.msra.mxu0 %v232
        %290 = vmatprep.subr.mxu0 0.0
        %291 = vmatpush1.msra.mxu0 0.0
        %292 = vmatprep.subr.mxu0 0.0
        %293 = vmatpush1.msra.mxu0 0.0
        %294 = vmatprep.subr.mxu0 0.0
        %295 = vmatpush1.msra.mxu0 0.0
        %296 = vmatprep.subr.mxu0 0.0
        %297 = vmatpush1.msra.mxu0 0.0
        %298 = vmatprep.subr.mxu0 0.0
        %299 = vmatpush1.msra.mxu0 0.0
        %300 = vmatprep.subr.mxu0 0.0
        %301 = vmatpush1.msra.mxu0 0.0
        %302 = vmatprep.subr.mxu0 0.0
        %303 = vmatpush1.msra.mxu0 0.0
        %304 = vmatprep.subr.mxu0 0.0
        %305 = vmatpush1.msra.mxu0 0.0
        %306 = vmatprep.subr.mxu0 0.0
        %307 = vmatpush1.msra.mxu0 0.0
        %308 = vmatprep.subr.mxu0 0.0
        %309 = vmatpush1.msra.mxu0 0.0
        %310 = vmatprep.subr.mxu0 0.0
        %311 = vmatpush1.msra.mxu0 0.0
        %312 = vmatprep.subr.mxu0 0.0
        %313 = vmatpush1.msra.mxu0 0.0
        %314 = vmatprep.subr.mxu0 0.0
        %315 = vmatpush1.msra.mxu0 0.0
        %316 = vmatprep.subr.mxu0 0.0
        %317 = vmatpush1.msra.mxu0 0.0
        %318 = vmatprep.subr.mxu0 0.0
        %319 = vmatpush1.msra.mxu0 0.0
        %320 = vmatprep.subr.mxu0 0.0
        %321 = vmatpush1.msra.mxu0 0.0
        %322 = vmatprep.subr.mxu0 0.0
        %323 = vmatpush1.msra.mxu0 0.0
        %324 = vmatprep.subr.mxu0 0.0
        %325 = vmatpush1.msra.mxu0 0.0
        %326 = vmatprep.subr.mxu0 0.0
        %327 = vmatpush1.msra.mxu0 0.0
        %328 = vmatprep.subr.mxu0 0.0
        %329 = vmatpush1.msra.mxu0 0.0
        %330 = vmatprep.subr.mxu0 0.0
        %331 = vmatpush1.msra.mxu0 0.0
        %332 = vmatprep.subr.mxu0 0.0
        %333 = vmatpush1.msra.mxu0 0.0
        %334 = vmatprep.subr.mxu0 0.0
        %335 = vmatpush1.msra.mxu0 0.0
        %336 = vmatprep.subr.mxu0 0.0
        %337 = vmatpush1.msra.mxu0 0.0
        %338 = vmatprep.subr.mxu0 0.0
        %339 = vmatpush1.msra.mxu0 0.0
        %340 = vmatprep.subr.mxu0 0.0
        %341 = vmatpush1.msra.mxu0 0.0
        %342 = vmatprep.subr.mxu0 0.0
        %343 = vmatpush1.msra.mxu0 0.0
        %344 = vmatprep.subr.mxu0 0.0
        %345 = vmatpush1.msra.mxu0 0.0
        %346 = vmatprep.mubr.f32.mxu0 0.0
        %347 = vmatmul.mubr.f32.gmra.mrb[0].mxu0 %v235
        %v348 = vpop.f32.mrb[0].mxu0
        %v349 = vadd.f32 0.0, %v348
        %v350 = vpop.f32.mrb[0].mxu0
        %351 = vmatprep.mubr.f32.mxu0 0.0
        %352 = vmatmul.mubr.f32.gmra.mrb[0].mxu0 %v238
        %v353 = vpop.f32.mrb[0].mxu0
        %v354 = vadd.f32 0.0, %v353
        %v355 = vpop.f32.mrb[0].mxu0
        %356 = vmatprep.mubr.f32.mxu0 0.0
        %357 = vmatmul.mubr.f32.gmra.mrb[0].mxu0 %v241
        %v358 = vpop.f32.mrb[0].mxu0
        %v359 = vadd.f32 0.0, %v358
        %v360 = vpop.f32.mrb[0].mxu0
        %361 = vmatprep.mubr.f32.mxu0 0.0
        %362 = vmatmul.mubr.f32.gmra.mrb[0].mxu0 %v244
        %v363 = vpop.f32.mrb[0].mxu0
        %v364 = vadd.f32 0.0, %v363
        %v365 = vpop.f32.mrb[0].mxu0
        %366 = vmatprep.mubr.f32.mxu0 0.0
        %367 = vmatmul.mubr.f32.gmra.mrb[0].mxu0 %v247
        %v368 = vpop.f32.mrb[0].mxu0
        %v369 = vadd.f32 0.0, %v368
        %v370 = vpop.f32.mrb[0].mxu0
        %371 = vmatprep.mubr.f32.mxu0 0.0
        %372 = vmatmul.mubr.f32.gmra.mrb[0].mxu0 %v250
        %v373 = vpop.f32.mrb[0].mxu0
        %v374 = vadd.f32 0.0, %v373
        %v375 = vpop.f32.mrb[0].mxu0
        %376 = vmatprep.mubr.f32.mxu0 0.0
        %377 = vmatmul.mubr.f32.gmra.mrb[0].mxu0 %v253
        %v378 = vpop.f32.mrb[0].mxu0
        %v379 = vadd.f32 0.0, %v378
        %v380 = vpop.f32.mrb[0].mxu0
        %381 = vmatprep.mubr.f32.mxu0 0.0
        %382 = vmatmul.mubr.f32.gmra.mrb[0].mxu0 %v256
        %v383 = vpop.f32.mrb[0].mxu0
        %v384 = vadd.f32 0.0, %v383
        %v385 = vpop.f32.mrb[0].mxu0
        %386 = vmatprep.mubr.f32.mxu0 0.0
        %387 = vmatmul.mubr.f32.gmra.mrb[0].mxu0 %v259
        %v388 = vpop.f32.mrb[0].mxu0
        %v389 = vadd.f32 0.0, %v388
        %v390 = vpop.f32.mrb[0].mxu0
        %391 = vmatprep.mubr.f32.mxu0 0.0
        %392 = vmatmul.mubr.f32.gmra.mrb[0].mxu0 %v262
        %v393 = vpop.f32.mrb[0].mxu0
        %v394 = vadd.f32 0.0, %v393
        %v395 = vpop.f32.mrb[0].mxu0
        %396 = vmatprep.mubr.f32.mxu0 0.0
        %397 = vmatmul.mubr.f32.gmra.mrb[0].mxu0 %v265
        %v398 = vpop.f32.mrb[0].mxu0
        %v399 = vadd.f32 0.0, %v398
        %v400 = vpop.f32.mrb[0].mxu0
        %401 = vmatprep.mubr.f32.mxu0 0.0
        %402 = vmatmul.mubr.f32.gmra.mrb[0].mxu0 %v268
        %v403 = vpop.f32.mrb[0].mxu0
        %v404 = vadd.f32 0.0, %v403
        %v405 = vpop.f32.mrb[0].mxu0
        %406 = vmatprep.mubr.f32.mxu0 0.0
        %407 = vmatmul.mubr.f32.gmra.mrb[0].mxu0 %v271
        %v408 = vpop.f32.mrb[0].mxu0
        %v409 = vadd.f32 0.0, %v408
        %v410 = vpop.f32.mrb[0].mxu0
        %411 = vmatprep.mubr.f32.mxu0 0.0
        %412 = vmatmul.mubr.f32.gmra.mrb[0].mxu0 %v274
        %v413 = vpop.f32.mrb[0].mxu0
        %v414 = vadd.f32 0.0, %v413
        %v415 = vpop.f32.mrb[0].mxu0
        %416 = vmatprep.mubr.f32.mxu0 0.0
        %417 = vmatmul.mubr.f32.gmra.mrb[0].mxu0 %v277
        %v418 = vpop.f32.mrb[0].mxu0
        %v419 = vadd.f32 0.0, %v418
        %v420 = vpop.f32.mrb[0].mxu0
        %421 = vmatprep.mubr.f32.mxu0 0.0
        %422 = vmatmul.mubr.f32.gmra.mrb[0].mxu0 %v280
        %v423 = vpop.f32.mrb[0].mxu0
        %v424 = vadd.f32 0.0, %v423
        %v425 = vpop.f32.mrb[0].mxu0
        %426 = vdwg.mxu0
        %427 = vst [vmem:[%s193] sm:$0xff] %v349
        %428 = vst [vmem:[%s193 + $0x8] sm:$0xff] %v354
        %429 = vst [vmem:[%s193 + $0x10] sm:$0xff] %v359
        %430 = vst [vmem:[%s193 + $0x18] sm:$0xff] %v364
        %431 = vst [vmem:[%s193 + $0x20] sm:$0xff] %v369
        %432 = vst [vmem:[%s193 + $0x28] sm:$0xff] %v374
        %433 = vst [vmem:[%s193 + $0x30] sm:$0xff] %v379
        %434 = vst [vmem:[%s193 + $0x38] sm:$0xff] %v384
        %435 = vst [vmem:[%s193 + $0x40] sm:$0xff] %v389
        %436 = vst [vmem:[%s193 + $0x48] sm:$0xff] %v394
        %437 = vst [vmem:[%s193 + $0x50] sm:$0xff] %v399
        %438 = vst [vmem:[%s193 + $0x58] sm:$0xff] %v404
        %439 = vst [vmem:[%s193 + $0x60] sm:$0xff] %v409
        %440 = vst [vmem:[%s193 + $0x68] sm:$0xff] %v414
        %441 = vst [vmem:[%s193 + $0x70] sm:$0xff] %v419
        %442 = vst [vmem:[%s193 + $0x78] sm:$0xff] %v424
        %s443 = sand.u32 %s103, 1
        %s444 = scalar_lea.sflag [#allocation3], %s443
        %s445 = sand.u32 %s103, 1
        %s446 = smul.addr %s445, 128
        %s447 = scalar_lea.vmem [#allocation2], %s446
        // Predicated region
        $region29: #{tpu_custom_call.1} parent=27 // pred_check
          %p448 = pneg %p113
        $region30: #{tpu_custom_call.1} parent=27 // pred_check_branch
          %450 = sbr.rel (%p448) target = $region32
        $region31: #{tpu_custom_call.1} parent=27 // pred_region
          %s451 = smul.u32 16, %s22
          %s453 = ssub.s32 2048, 2048
          %454 = vsyncadd %s444, %s453
          %s455 = sadd.s32 %s23, %s451
          %s456 = smul.addr %s21, 16
          %s457 = sadd.s32 %s455, %s456
          %s458 = smul.addr %s457, 128
          %s459 = scalar_lea.hbm %s2, %s458
          %s460 = sshll.u32 %s447, 4
          %s461 = int_to_ptr.vmem [resolvable:$true] %s460
          %466 = dma.vmem_to_hbm [thread:$0]  %s461, 2048, %s459, %s444, 128, 128, 8
        $region32: #{tpu_custom_call.1} parent=27 // pred_fallthru
          _
      $region28: #{tpu_custom_call.1} parent=5 // pred_fallthru
        _
      %p467 = scmp.le.s32.totalorder 2, %s11
      // Predicated region
      $region33: #{tpu_custom_call.1} parent=5 // pred_check
        %p468 = pneg %p467
      $region34: #{tpu_custom_call.1} parent=5 // pred_check_branch
        %470 = sbr.rel (%p468) target = $region36
      $region35: #{tpu_custom_call.1} parent=5 // pred_region
        %s471 = ssub.s32 %s11, 2
        // Predicated region
        $region37: #{tpu_custom_call.1} parent=35 // pred_check
          %p472 = pneg %p119
        $region38: #{tpu_custom_call.1} parent=35 // pred_check_branch
          %474 = sbr.rel (%p472) target = $region40
        $region39: #{tpu_custom_call.1} parent=35 // pred_region
          %s475 = sand.u32 %s104, 1
          %s476 = scalar_lea.sflag [#allocation3], %s475
          %s477 = sand.u32 %s104, 1
          %s478 = smul.addr %s477, 128
          %s479 = scalar_lea.vmem [#allocation2], %s478
          %480 = dma.done %s476, 2048
        $region40: #{tpu_custom_call.1} parent=35 // pred_fallthru
          _
      $region36: #{tpu_custom_call.1} parent=5 // pred_fallthru
        _
    $region6: #{tpu_custom_call.1} parent=1 // loop_footer
      %s15 = sadd.s32 1, %s11
    $region7: #{tpu_custom_call.1} parent=1 // loop_footer_branch
      %10 = sbr.rel target = $region3
    $region8: #{tpu_custom_call.1} parent=1 // loop_exit
      _
    %481 = vsyncpa [#allocation3], 1
    %s482 = scalar_lea.sflag [#allocation3], 1
    %483 = vsyncpa %s482, 1

</llo_original>
